<compile_context>
chip_gen: v6e
topology: v6e:2x2x1
jax: 0.10.0
libtpu: 0.0.40
codegen_flags: <defaults>
</compile_context>

<pallas_src>
import jax
import jax.numpy as jnp
from jax.experimental import pallas as pl
from jax.experimental.pallas import tpu as pltpu

HALPE2LSP = (16, 14, 12, 11, 13, 15, 10, 8, 6, 5, 7, 9, 18, 17)
NUM_LSP = len(HALPE2LSP)          # 14
NUM_COORD = 3
JOINT_WEIGHT = 5.0


def _round_up(x: int, m: int) -> int:
    return (x + m - 1) // m * m


def _vmem_budget_bytes() -> int:
    """Generation-aware VMEM budget (half of physical, capped at 64 MiB)."""
    cap = None
    try:
        info = pltpu.get_tpu_info()
        cap = getattr(info, "vmem_capacity_bytes", None)
    except Exception:
        cap = None
    if not cap:
        cap = 64 * 1024 * 1024        # conservative fallback (v7x physical)
    return int(min(cap // 2, 64 * 1024 * 1024))


def _joint_loss_kernel(d_ref, w_ref, out_ref):
    """One lane-tile of the masked, conf-weighted, pelvis-centered MSE sum.

    d_ref:   [3, 14, BT]  f32 VMEM  centered difference (pred_c - gt_c)
    w_ref:   [14, BT]     f32 VMEM  conf * validity mask (0 on padded lanes)
    out_ref: [1, 1, 128]  f32 VMEM  per-tile partial sum (lane 0), zeros elsewhere
    """
    w = w_ref[...]                                   # [14, BT]
    # Per-coordinate rows keep VMEM temporaries at [14, BT] instead of
    # materializing the full [3, 14, BT] product.
    total = (jnp.sum(w * d_ref[0] * d_ref[0])
             + jnp.sum(w * d_ref[1] * d_ref[1])
             + jnp.sum(w * d_ref[2] * d_ref[2]))
    lane = jax.lax.broadcasted_iota(jnp.int32, (1, 1, 128), 2)
    out_ref[...] = jnp.where(lane == 0, total, jnp.float32(0.0))


def joint_loss_pallas(pred_joints, gt_joints, has_3d, valid, *, lane_tile=None):
    """Wrapper: LSP gather + centering + conf*mask fusion + lane-dense kernel.

    pred_joints: [B, 26, 3]   gt_joints: [B, 26, 4]   has_3d/valid: [B]
    """
    pred_joints = jnp.asarray(pred_joints, jnp.float32)
    gt_joints = jnp.asarray(gt_joints, jnp.float32)
    has_3d = jnp.asarray(has_3d, jnp.float32)
    valid = jnp.asarray(valid, jnp.float32)
    b = pred_joints.shape[0]

    idx = jnp.asarray(HALPE2LSP, dtype=jnp.int32)
    p_lsp = jnp.take(pred_joints, idx, axis=1)               # [B, 14, 3]
    g_lsp = jnp.take(gt_joints, idx, axis=1)                 # [B, 14, 4]

    # Exact `== 1` to match the PyTorch boolean indexing semantics.
    mask = ((valid == 1) & (has_3d == 1)).astype(jnp.float32)        # [B]

    g_xyz = g_lsp[:, :, :3]
    conf = g_lsp[:, :, 3]                                            # [B, 14]
    g_pel = (g_xyz[:, 2, :] + g_xyz[:, 3, :]) * 0.5                  # [B, 3]
    p_pel = (p_lsp[:, 2, :] + p_lsp[:, 3, :]) * 0.5                  # [B, 3]
    diff = (p_lsp - p_pel[:, None, :]) - (g_xyz - g_pel[:, None, :]) # [B,14,3]

    # PyTorch drops invalid samples before arithmetic: guard against
    # non-finite values in dropped rows (0 * Inf would poison the sum).
    diff = jnp.where(mask[:, None, None] > 0, diff, 0.0)
    weight = jnp.where(mask[:, None] > 0, conf, 0.0)                 # [B, 14]

    # Lane-dense layout: batch on lanes, joints on sublanes.
    d_t = jnp.transpose(diff, (2, 1, 0))                     # [3, 14, B]
    w_t = jnp.transpose(weight, (1, 0))                      # [14, B]

    # Generation-aware lane-tile sizing:
    #   per-set VMEM ~ (3*16 + 16) * 4 B/lane = 256 B/lane, double-buffered
    #   ~512 B/lane -> budget/2048 lanes leaves ~4x headroom.
    budget = _vmem_budget_bytes()
    lane_tile_max = max(128, min(32768, (budget // 2048) // 128 * 128))
    if lane_tile is None:
        bt = min(_round_up(b, 128), lane_tile_max)
    else:
        bt = _round_up(int(lane_tile), 128)
    bp = _round_up(b, bt)
    nt = bp // bt
    pad = bp - b
    if pad:
        # Padded lanes carry weight 0 and diff 0 -> contribute nothing.
        d_t = jnp.pad(d_t, ((0, 0), (0, 0), (0, pad)))
        w_t = jnp.pad(w_t, ((0, 0), (0, pad)))

    partials = pl.pallas_call(
        _joint_loss_kernel,
        out_shape=jax.ShapeDtypeStruct((nt, 1, 128), jnp.float32),
        grid=(nt,),
        in_specs=[
            pl.BlockSpec((NUM_COORD, NUM_LSP, bt), lambda i: (0, 0, i)),  # diff
            pl.BlockSpec((NUM_LSP, bt), lambda i: (0, i)),                # weight
        ],
        out_specs=pl.BlockSpec((1, 1, 128), lambda i: (i, 0, 0)),
        compiler_params=pltpu.CompilerParams(
            # Each tile writes its own output block -> legally parallel
            # (both v7x TensorCores participate; no carried accumulator).
            dimension_semantics=("parallel",),
            vmem_limit_bytes=budget,
            # Let XLA fuse the gather/center/transpose/pad producers into the
            # pallas_call operands instead of materializing them in HBM.
            allow_input_fusion=[True, True],
        ),
    )(d_t, w_t)

    # Tiny finalize on nt*128 partials: sum, divide, scale.
    total = jnp.sum(partials)
    n = jnp.sum(mask)
    denom = jnp.maximum(n * jnp.float32(NUM_LSP * NUM_COORD), jnp.float32(1.0))
    loss = jnp.where(n > 0, total / denom, jnp.float32(0.0)) * jnp.float32(JOINT_WEIGHT)
    return {"joint_loss": loss}


def joint_loss_ref(pred_joints, gt_joints, has_3d, valid):
    """Pure-JAX reference reproducing the PyTorch forward."""
    idx = jnp.asarray(HALPE2LSP, dtype=jnp.int32)
    p = jnp.take(jnp.asarray(pred_joints, jnp.float32), idx, axis=1)
    g = jnp.take(jnp.asarray(gt_joints, jnp.float32), idx, axis=1)
    m = ((jnp.asarray(valid) == 1) & (jnp.asarray(has_3d) == 1)).astype(jnp.float32)
    m3 = m[:, None, None]

    conf = g[:, :, 3:4]
    g_xyz = g[:, :, 0:3]
    g_pel = (g_xyz[:, 2:3, :] + g_xyz[:, 3:4, :]) * 0.5
    p_pel = (p[:, 2:3, :] + p[:, 3:4, :]) * 0.5
    sq = conf * ((p - p_pel) - (g_xyz - g_pel)) ** 2
    total = jnp.sum(sq * m3)
    n = jnp.sum(m)
    denom = jnp.maximum(n * float(NUM_LSP * NUM_COORD), 1.0)
    return jnp.where(n > 0.0, total / denom, 0.0) * JOINT_WEIGHT


if __name__ == "__main__":
    key = jax.random.PRNGKey(0)
    k1, k2, k3, k4, k5, k6 = jax.random.split(key, 6)

    # --- small default case: single grid step ---
    B, J_HALPE = 8, 26
    pred_joints = jax.random.normal(k1, (B, J_HALPE, 3), dtype=jnp.float32)
    gt_xyz = jax.random.normal(k2, (B, J_HALPE, 3), dtype=jnp.float32)
    gt_conf = jax.random.uniform(k3, (B, J_HALPE, 1), dtype=jnp.float32)
    gt_joints = jnp.concatenate([gt_xyz, gt_conf], axis=-1)            # [B, 26, 4]
    has_3d = jnp.array([1, 0, 1, 1, 0, 1, 1, 0], dtype=jnp.float32)
    valid = jnp.array([1, 1, 1, 0, 1, 1, 0, 1], dtype=jnp.float32)

    loss = joint_loss_pallas(pred_joints, gt_joints, has_3d, valid)["joint_loss"]
    loss = jax.block_until_ready(loss)
    ref = joint_loss_ref(pred_joints, gt_joints, has_3d, valid)
    assert jnp.allclose(loss, ref, rtol=1e-4, atol=1e-6), (loss, ref)

    # --- empty-selection branch (-> 0) ---
    loss0 = joint_loss_pallas(
        pred_joints, gt_joints, jnp.zeros((B,), jnp.float32), valid)["joint_loss"]
    loss0 = jax.block_until_ready(loss0)
    assert jnp.allclose(loss0, 0.0), loss0

    # --- multi-tile grid path (forces nt > 1 with a small lane tile) ---
    B2 = 300
    pred2 = jax.random.normal(k4, (B2, J_HALPE, 3), dtype=jnp.float32)
    gt2 = jnp.concatenate(
        [jax.random.normal(k5, (B2, J_HALPE, 3), dtype=jnp.float32),
         jax.random.uniform(k6, (B2, J_HALPE, 1), dtype=jnp.float32)], axis=-1)
    has_3d2 = (jax.random.uniform(jax.random.PRNGKey(1), (B2,)) > 0.3).astype(jnp.float32)
    valid2 = (jax.random.uniform(jax.random.PRNGKey(2), (B2,)) > 0.2).astype(jnp.float32)
    loss2 = joint_loss_pallas(pred2, gt2, has_3d2, valid2, lane_tile=128)["joint_loss"]
    loss2 = jax.block_until_ready(loss2)
    ref2 = joint_loss_ref(pred2, gt2, has_3d2, valid2)
    assert jnp.allclose(loss2, ref2, rtol=1e-4, atol=1e-5), (loss2, ref2)

    print("KERNEL_OK")
</pallas_src>

<mosaic_0001>
module attributes {stable_mosaic.version = 11 : i64} {
  func.func @_joint_loss_kernel(%arg0: i32, %arg1: memref<3x14x128xf32, #tpu.memory_space<vmem>>, %arg2: memref<14x128xf32, #tpu.memory_space<vmem>>, %arg3: memref<1x1x128xf32, #tpu.memory_space<vmem>>) attributes {dimension_semantics = [#tpu.dimension_semantics<parallel>], iteration_bounds = array<i64: 1>, scalar_prefetch = 0 : i64, scratch_operands = 0 : i64, tpu.core_type = #tpu.core_type<tc>, window_params = [{transform_indices = @transform_0, window_bounds = array<i64: 3, 14, 128>}, {transform_indices = @transform_1, window_bounds = array<i64: 14, 128>}, {transform_indices = @transform_2, window_bounds = array<i64: 1, 1, 128>}]} {
    %c0 = arith.constant 0 : index
    %c0_0 = arith.constant 0 : index
    %0 = vector.load %arg2[%c0, %c0_0] : memref<14x128xf32, #tpu.memory_space<vmem>>, vector<14x128xf32>
    %c0_1 = arith.constant 0 : index
    %c0_2 = arith.constant 0 : index
    %c0_3 = arith.constant 0 : index
    %1 = vector.load %arg1[%c0_1, %c0_2, %c0_3] : memref<3x14x128xf32, #tpu.memory_space<vmem>>, vector<1x14x128xf32>
    %2 = vector.shape_cast %1 : vector<1x14x128xf32> to vector<14x128xf32>
    %3 = arith.mulf %0, %2 : vector<14x128xf32>
    %c0_4 = arith.constant 0 : index
    %c0_5 = arith.constant 0 : index
    %c0_6 = arith.constant 0 : index
    %4 = vector.load %arg1[%c0_4, %c0_5, %c0_6] : memref<3x14x128xf32, #tpu.memory_space<vmem>>, vector<1x14x128xf32>
    %5 = vector.shape_cast %4 : vector<1x14x128xf32> to vector<14x128xf32>
    %6 = arith.mulf %3, %5 : vector<14x128xf32>
    %7 = vector.shape_cast %6 : vector<14x128xf32> to vector<1x14x128xf32>
    %cst = arith.constant dense<0.000000e+00> : vector<1xf32>
    %8 = vector.multi_reduction <add>, %7, %cst [1, 2] : vector<1x14x128xf32> to vector<1xf32>
    %9 = vector.shape_cast %8 : vector<1xf32> to vector<1x1x1xf32>
    %10 = vector.extract %9[0, 0, 0] : f32 from vector<1x1x1xf32>
    %c1 = arith.constant 1 : index
    %c0_7 = arith.constant 0 : index
    %c0_8 = arith.constant 0 : index
    %11 = vector.load %arg1[%c1, %c0_7, %c0_8] : memref<3x14x128xf32, #tpu.memory_space<vmem>>, vector<1x14x128xf32>
    %12 = vector.shape_cast %11 : vector<1x14x128xf32> to vector<14x128xf32>
    %13 = arith.mulf %0, %12 : vector<14x128xf32>
    %c1_9 = arith.constant 1 : index
    %c0_10 = arith.constant 0 : index
    %c0_11 = arith.constant 0 : index
    %14 = vector.load %arg1[%c1_9, %c0_10, %c0_11] : memref<3x14x128xf32, #tpu.memory_space<vmem>>, vector<1x14x128xf32>
    %15 = vector.shape_cast %14 : vector<1x14x128xf32> to vector<14x128xf32>
    %16 = arith.mulf %13, %15 : vector<14x128xf32>
    %17 = vector.shape_cast %16 : vector<14x128xf32> to vector<1x14x128xf32>
    %cst_12 = arith.constant dense<0.000000e+00> : vector<1xf32>
    %18 = vector.multi_reduction <add>, %17, %cst_12 [1, 2] : vector<1x14x128xf32> to vector<1xf32>
    %19 = vector.shape_cast %18 : vector<1xf32> to vector<1x1x1xf32>
    %20 = vector.extract %19[0, 0, 0] : f32 from vector<1x1x1xf32>
    %21 = arith.addf %10, %20 : f32
    %c2 = arith.constant 2 : index
    %c0_13 = arith.constant 0 : index
    %c0_14 = arith.constant 0 : index
    %22 = vector.load %arg1[%c2, %c0_13, %c0_14] : memref<3x14x128xf32, #tpu.memory_space<vmem>>, vector<1x14x128xf32>
    %23 = vector.shape_cast %22 : vector<1x14x128xf32> to vector<14x128xf32>
    %24 = arith.mulf %0, %23 : vector<14x128xf32>
    %c2_15 = arith.constant 2 : index
    %c0_16 = arith.constant 0 : index
    %c0_17 = arith.constant 0 : index
    %25 = vector.load %arg1[%c2_15, %c0_16, %c0_17] : memref<3x14x128xf32, #tpu.memory_space<vmem>>, vector<1x14x128xf32>
    %26 = vector.shape_cast %25 : vector<1x14x128xf32> to vector<14x128xf32>
    %27 = arith.mulf %24, %26 : vector<14x128xf32>
    %28 = vector.shape_cast %27 : vector<14x128xf32> to vector<1x14x128xf32>
    %cst_18 = arith.constant dense<0.000000e+00> : vector<1xf32>
    %29 = vector.multi_reduction <add>, %28, %cst_18 [1, 2] : vector<1x14x128xf32> to vector<1xf32>
    %30 = vector.shape_cast %29 : vector<1xf32> to vector<1x1x1xf32>
    %31 = vector.extract %30[0, 0, 0] : f32 from vector<1x1x1xf32>
    %32 = arith.addf %21, %31 : f32
    %33 = tpu.iota {dimensions = array<i32: 2>} : vector<1x1x128xi32>
    %c0_i32 = arith.constant 0 : i32
    %34 = vector.broadcast %c0_i32 : i32 to vector<1x1x128xi32>
    %35 = arith.cmpi eq, %33, %34 : vector<1x1x128xi32>
    %cst_19 = arith.constant 0.000000e+00 : f32
    %36 = vector.broadcast %32 : f32 to vector<1x1x128xf32>
    %37 = vector.broadcast %cst_19 : f32 to vector<1x1x128xf32>
    %38 = arith.select %35, %36, %37 : vector<1x1x128xi1>, vector<1x1x128xf32>
    %c0_20 = arith.constant 0 : index
    %c0_21 = arith.constant 0 : index
    %c0_22 = arith.constant 0 : index
    %39 = vector.load %arg3[%c0_20, %c0_21, %c0_22] : memref<1x1x128xf32, #tpu.memory_space<vmem>>, vector<1x1x128xf32>
    tpu.vector_store %arg3[%c0_20, %c0_21, %c0_22], %38 {strides = array<i32>} : memref<1x1x128xf32, #tpu.memory_space<vmem>>, vector<1x1x128xf32>,
    return
  }
  func.func @transform_0(%arg0: i32) -> (i32, i32, i32) {
    %c0_i32 = arith.constant 0 : i32
    %c0_i32_0 = arith.constant 0 : i32
    %c0_i32_1 = arith.constant 0 : i32
    return %c0_i32, %c0_i32_0, %arg0 : i32, i32, i32
  }
  func.func @transform_1(%arg0: i32) -> (i32, i32) {
    %c0_i32 = arith.constant 0 : i32
    %c0_i32_0 = arith.constant 0 : i32
    return %c0_i32, %arg0 : i32, i32
  }
  func.func @transform_2(%arg0: i32) -> (i32, i32, i32) {
    %c0_i32 = arith.constant 0 : i32
    %c0_i32_0 = arith.constant 0 : i32
    %c0_i32_1 = arith.constant 0 : i32
    return %arg0, %c0_i32, %c0_i32_0 : i32, i32, i32
  }
}

</mosaic_0001>

<llo_original>
// kernel: tpu_custom_call.1
$region0: #{tpu_custom_call.1}
  #allocation0 [shape = 'u32[]', space=smem, size = 0x4, offset = 0x4, fixed_abs, tag = 'smem constant byte address 0x4 - core index']
  #allocation1 [shape = 'u32[144,128]{1,0:T(1,128)}', space=vmem, size = 0x12000, scoped, tag = 'internal scratch']
  %s0 = inlined_call_operand.hbm [shape: f32[3,14,128], index: 0, kind: input, shape index: {}]
  %s1 = inlined_call_operand.hbm [shape: f32[14,128], index: 1, kind: input, shape index: {}]
  %s2 = inlined_call_operand.hbm [shape: f32[1,1,128], index: 2, kind: output, shape index: {}]
  %s3 = sld [smem:[#allocation0]]
  $region26: #{tpu_custom_call.1} parent=0
    _
  %s5 = ssub.s32 1, %s3
  %s6 = scalar_select 0, %s5, %s3
  $region1: #{tpu_custom_call.1} parent=0
    #allocation2 [shape = 'u8[24576]{0}', space=vmem, size = 0x6000, scoped, tag = 'input window, operand 0, single buffered']
    #allocation3 [shape = 's32[1]{0}', space=sflag, size = 0x4, scoped, tag = 'scoped memory for tpu_custom_call.1']
    #allocation4 [shape = 's32[1]{0}', space=sflag, size = 0x4, scoped, tag = 'scoped memory for tpu_custom_call.1']
    #allocation5 [shape = 'u8[8192]{0}', space=vmem, size = 0x2000, scoped, tag = 'input window, operand 1, single buffered']
    #allocation6 [shape = 's32[1]{0}', space=sflag, size = 0x4, scoped, tag = 'scoped memory for tpu_custom_call.1']
    #allocation7 [shape = 'u8[512]{0}', space=vmem, size = 0x400, scoped, tag = 'output window, operand 0, single buffered']
    %7 = vsyncpa [#allocation3], 0
    %8 = vsyncpa [#allocation6], 0
    %9 = vsyncpa [#allocation4], 0
    // Predicated region
    $region2: #{tpu_custom_call.1} parent=1 // pred_check
      _
    $region3: #{tpu_custom_call.1} parent=1 // pred_check_branch
      %11 = sbr.rel (0) target = $region5
    $region4: #{tpu_custom_call.1} parent=1 // pred_region
      %s13 = ssub.s32 768, 768
      %14 = vsyncadd [#allocation3], %s13
      %s15 = sshll.u32 [#allocation2], 4
      %s16 = int_to_ptr.vmem [resolvable:$true] %s15
      %21 = dma.hbm_to_vmem [thread:$0]  %s0, 768, %s16, [#allocation3], 128, 128, 8
    $region5: #{tpu_custom_call.1} parent=1 // pred_fallthru
      _
    // Predicated region
    $region6: #{tpu_custom_call.1} parent=1 // pred_check
      _
    $region7: #{tpu_custom_call.1} parent=1 // pred_check_branch
      %23 = sbr.rel (0) target = $region9
    $region8: #{tpu_custom_call.1} parent=1 // pred_region
      %s25 = ssub.s32 256, 256
      %26 = vsyncadd [#allocation6], %s25
      %s27 = sshll.u32 [#allocation5], 4
      %s28 = int_to_ptr.vmem [resolvable:$true] %s27
      %33 = dma.hbm_to_vmem [thread:$0]  %s1, 256, %s28, [#allocation6], 128, 128, 8
    $region9: #{tpu_custom_call.1} parent=1 // pred_fallthru
      _
    // Predicated region
    $region10: #{tpu_custom_call.1} parent=1 // pred_check
      _
    $region11: #{tpu_custom_call.1} parent=1 // pred_check_branch
      %35 = sbr.rel (0) target = $region13
    $region12: #{tpu_custom_call.1} parent=1 // pred_region
      %36 = dma.done [#allocation3], 768
    $region13: #{tpu_custom_call.1} parent=1 // pred_fallthru
      _
    // Predicated region
    $region14: #{tpu_custom_call.1} parent=1 // pred_check
      _
    $region15: #{tpu_custom_call.1} parent=1 // pred_check_branch
      %38 = sbr.rel (0) target = $region17
    $region16: #{tpu_custom_call.1} parent=1 // pred_region
      %39 = dma.done [#allocation6], 256
    $region17: #{tpu_custom_call.1} parent=1 // pred_fallthru
      _
    %v40 = vld [vmem:[#allocation5] sm:$0xff]
    %v41 = vld [vmem:[#allocation5 + $0x8] sm:$0x3f]
    %v42 = vld [vmem:[#allocation2] sm:$0xff]
    %v43 = vld [vmem:[#allocation2 + $0x8] sm:$0x3f]
    %v44 = vmul.f32 %v40, %v42
    %v45 = vmul.f32 %v41, %v43
    %v46 = vmul.f32 %v44, %v42
    %v47 = vmul.f32 %v45, %v43
    %vm48 = vcmask 1045504
    %v49 = vsel %vm48, %v47, 0.0
    %v50 = vadd.f32 %v46, %v49
    %51 = vadd.xlane.f32.xlu0 %v50
    %v52 = vpop.xlane.xlu0 %51
    %v53 = vrot.slane %v52, 4
    %v54 = vadd.f32 %v52, %v53
    %v55 = vrot.slane %v54, 2
    %v56 = vadd.f32 %v54, %v55
    %v57 = vrot.slane %v56, 1
    %v58 = vadd.f32 %v56, %v57
    %s59 = vtos %v58
    %s60 = scalar_lea.vmem [#allocation2], 16
    %v61 = vld [vmem:[%s60] sm:$0xff]
    %v62 = vld [vmem:[%s60 + $0x8] sm:$0x3f]
    %v63 = vmul.f32 %v40, %v61
    %v64 = vmul.f32 %v41, %v62
    %v65 = vmul.f32 %v63, %v61
    %v66 = vmul.f32 %v64, %v62
    %v67 = vsel %vm48, %v66, 0.0
    %v68 = vadd.f32 %v65, %v67
    %69 = vadd.xlane.f32.xlu0 %v68
    %v70 = vpop.xlane.xlu0 %69
    %v71 = vrot.slane %v70, 4
    %v72 = vadd.f32 %v70, %v71
    %v73 = vrot.slane %v72, 2
    %v74 = vadd.f32 %v72, %v73
    %v75 = vrot.slane %v74, 1
    %v76 = vadd.f32 %v74, %v75
    %s77 = vtos %v76
    %s78 = sadd.f32 %s59, %s77
    %s79 = scalar_lea.vmem [#allocation2], 32
    %v80 = vld [vmem:[%s79] sm:$0xff]
    %v81 = vld [vmem:[%s79 + $0x8] sm:$0x3f]
    %v82 = vmul.f32 %v40, %v80
    %v83 = vmul.f32 %v41, %v81
    %v84 = vmul.f32 %v82, %v80
    %v85 = vmul.f32 %v83, %v81
    %v86 = vsel %vm48, %v85, 0.0
    %v87 = vadd.f32 %v84, %v86
    %88 = vadd.xlane.f32.xlu0 %v87
    %v89 = vpop.xlane.xlu0 %88
    %v90 = vrot.slane %v89, 4
    %v91 = vadd.f32 %v89, %v90
    %v92 = vrot.slane %v91, 2
    %v93 = vadd.f32 %v91, %v92
    %v94 = vrot.slane %v93, 1
    %v95 = vadd.f32 %v93, %v94
    %s96 = vtos %v95
    %s97 = sadd.f32 %s78, %s96
    %v98 = vlaneseq
    %v99 = vand.u32 %v98, 127
    %vm100 = vcmp.eq.s32.totalorder %v99, 0
    %v101 = vstv %s97
    %v102 = vsel %vm100, %v101, 0.0
    %103 = vst [vmem:[#allocation7] sm:$0x1] %v102
    // Predicated region
    $region18: #{tpu_custom_call.1} parent=1 // pred_check
      _
    $region19: #{tpu_custom_call.1} parent=1 // pred_check_branch
      %105 = sbr.rel (0) target = $region21
    $region20: #{tpu_custom_call.1} parent=1 // pred_region
      %s107 = ssub.s32 16, 16
      %108 = vsyncadd [#allocation4], %s107
      %s110 = sshll.u32 [#allocation7], 4
      %s111 = int_to_ptr.vmem [resolvable:$true] %s110
      %113 = dma.vmem_to_hbm [thread:$0]  %s111, 16, %s2, [#allocation4]
    $region21: #{tpu_custom_call.1} parent=1 // pred_fallthru
      _
    // Predicated region
    $region22: #{tpu_custom_call.1} parent=1 // pred_check
      _
    $region23: #{tpu_custom_call.1} parent=1 // pred_check_branch
      %115 = sbr.rel (0) target = $region25
    $region24: #{tpu_custom_call.1} parent=1 // pred_region
      %116 = dma.done [#allocation4], 16
    $region25: #{tpu_custom_call.1} parent=1 // pred_fallthru
      _
    %117 = vsyncpa [#allocation3], 1
    %118 = vsyncpa [#allocation6], 1
    %119 = vsyncpa [#allocation4], 1

</llo_original>
